<compile_context>
chip_gen: v5e
topology: v5e:2x2
jax: 0.10.0
libtpu: 0.0.40
codegen_flags: <defaults>
</compile_context>

<pallas_src>
import jax
import jax.numpy as jnp
from jax.experimental import pallas as pl
from jax.experimental.pallas import tpu as pltpu


# ----------------------------------------------------------------------------
# Zero-copy identity: output aliases the input HBM buffer, kernel does nothing.
# ----------------------------------------------------------------------------
def _identity_alias_kernel(x_hbm_ref, o_hbm_ref):
    # Output buffer IS the input buffer (input_output_aliases={0: 0}), so the
    # identity result is already in place: no DMA, no compute.
    del x_hbm_ref, o_hbm_ref


def identity_projection(x: jax.Array) -> jax.Array:
    """Identity projection with no materialized HBM->HBM copy."""
    return pl.pallas_call(
        _identity_alias_kernel,
        out_shape=jax.ShapeDtypeStruct(x.shape, x.dtype),
        in_specs=[pl.BlockSpec(memory_space=pl.ANY)],
        out_specs=pl.BlockSpec(memory_space=pl.ANY),
        input_output_aliases={0: 0},
    )(x)


# ----------------------------------------------------------------------------
# Optimized copy variant (only if a distinct output buffer is truly required).
# ----------------------------------------------------------------------------
def _copy_kernel(x_ref, o_ref):
    o_ref[...] = x_ref[...]


def identity_projection_copy(x: jax.Array) -> jax.Array:
    """Identity as an explicit, tuned VMEM-tiled copy (fresh output buffer)."""
    orig_shape = x.shape
    dtype = x.dtype
    total = x.size
    if total == 0:
        return x

    # Lane-dense layout: make the last dim a large multiple of 128 when the
    # element count allows (avoids masked vst.msk partial stores).
    lane = None
    for w in (1024, 512, 256, 128):
        if total % w == 0:
            lane = w
            break
    if lane is None:
        # Fall back to the natural (rows, hidden) layout (full-extent last dim
        # is always a legal block dim).
        lane = orig_shape[-1] if x.ndim >= 1 else 1

    x2d = x.reshape(-1, lane)
    rows = x2d.shape[0]

    # Dtype-aware sublane multiple: 8 for 4-byte, 16 for bf16, 32 for int8/fp8.
    itemsize = jnp.dtype(dtype).itemsize
    sub = max(8, 32 // max(itemsize, 1))

    # Keep each tile <= 2 MiB so double-buffered in+out tiles (4x) stay <= 8 MiB:
    # well under the scoped-VMEM defaults on every generation (v5e/v6e/v7x).
    tile_budget_bytes = 2 * 1024 * 1024
    max_rows = max(sub, tile_budget_bytes // (lane * itemsize))
    if rows <= max_rows:
        row_block = rows                       # single full-extent block
    else:
        row_block = (max_rows // sub) * sub    # large, sublane-aligned tile

    grid = (pl.cdiv(rows, row_block),)         # ragged last block handled by Pallas

    out = pl.pallas_call(
        _copy_kernel,
        out_shape=jax.ShapeDtypeStruct((rows, lane), dtype),
        grid=grid,
        in_specs=[pl.BlockSpec((row_block, lane), lambda i: (i, 0))],
        out_specs=pl.BlockSpec((row_block, lane), lambda i: (i, 0)),
        compiler_params=pltpu.CompilerParams(
            dimension_semantics=("parallel",),  # lets v7x shard rows over 2 TCs
        ),
    )(x2d)
    return out.reshape(orig_shape)


class IdentityProjectionJAX:
    """JAX/Pallas counterpart of the PyTorch IdentityProjection module."""

    def __init__(self, in_dim: int, out_dim: int):
        # nn.Identity has no parameters; in_dim/out_dim are stored but unused.
        self.in_dim = in_dim
        self.out_dim = out_dim

    def __call__(self, x: jax.Array) -> jax.Array:
        return identity_projection(x)


if __name__ == "__main__":
    key = jax.random.PRNGKey(0)
    # Small shapes consistent with a sequence-projection module:
    # batch=2, seq=8, hidden=32
    x = jax.random.normal(key, (2, 8, 32), dtype=jnp.float32)

    module = IdentityProjectionJAX(in_dim=32, out_dim=32)

    # Hot path: zero-copy aliased identity.
    y = jax.jit(module.__call__)(x)
    y = jax.block_until_ready(y)
    assert y.shape == x.shape, (y.shape, x.shape)
    assert y.dtype == x.dtype, (y.dtype, x.dtype)
    assert jnp.array_equal(y, x), "aliased identity projection mismatch"

    # Explicit-copy variant (fresh buffer), tuned tiling.
    y2 = jax.jit(identity_projection_copy)(x)
    y2 = jax.block_until_ready(y2)
    assert y2.shape == x.shape and y2.dtype == x.dtype
    assert jnp.array_equal(y2, x), "copy identity projection mismatch"

    print("KERNEL_OK")
</pallas_src>

<mosaic_0001>
module attributes {stable_mosaic.version = 11 : i64} {
  func.func @_identity_alias_kernel(%arg0: memref<2x8x32xf32, #tpu.memory_space<any>>, %arg1: memref<2x8x32xf32, #tpu.memory_space<any>>) attributes {dimension_semantics = [], scalar_prefetch = 0 : i64, scratch_operands = 0 : i64, tpu.core_type = #tpu.core_type<tc>} {
    return
  }
}

</mosaic_0001>

<llo_original>
// kernel: a_call__.1
$region0: #{a_call__.1}
  #allocation0 [shape = 'u32[]', space=smem, size = 0x4, offset = 0x4, fixed_abs, tag = 'smem constant byte address 0x4 - core index']
  #allocation1 [shape = 'u32[72,128]{1,0:T(1,128)}', space=vmem, size = 0x9000, scoped, tag = 'internal scratch']
  %s0 = inlined_call_operand.hbm [shape: f32[2,8,32], index: 0, kind: input, shape index: {}, may-alias: {0,1}]
  %s1 = inlined_call_operand.hbm [shape: f32[2,8,32], index: 1, kind: output, shape index: {}, may-alias: {0,1}]
  %s2 = sld [smem:[#allocation0]]
  $region2: #{a_call__.1} parent=0
    _
  %s4 = ssub.s32 1, %s2
  %s5 = scalar_select 0, %s4, %s2

</llo_original>
